<compile_context>
chip_gen: v5e
topology: v5e:2x2
jax: 0.10.0
libtpu: 0.0.40
codegen_flags: <defaults>
</compile_context>

<pallas_src>
import functools

import jax
import jax.numpy as jnp
from jax.experimental import pallas as pl
from jax.experimental.pallas import tpu as pltpu


_LANE = 128
_TK_CAP = 2048                       # keeps good pipelining granularity
_VMEM_BUDGET = 20 * 1024 * 1024      # bytes used for tile sizing (v5e-safe)
_VMEM_LIMIT = 32 * 1024 * 1024       # scoped VMEM limit handed to Mosaic


def _choose_tm(M):
    # Split G rows across the grid (and the two v7x TensorCores) only when the
    # matmul is large enough to be compute-bound; a row split duplicates RHS
    # DMA traffic, which hurts in the memory-bound small-M regime.
    if M >= 512 and M % 256 == 0:
        return 256
    return M


def _choose_tk(M, K, tm, itemsize, with_target):
    # Resident f32 VMEM per row-block:
    #   G output (double-buffered) + f32 accumulator [+ target, double-buffered]
    resident_bufs = 3 + (2 if with_target else 0)
    fixed = resident_bufs * tm * M * 4
    # Per-K-column VMEM: double-buffered LHS row slab + RHS full slab.
    per_k = 2 * (tm + M) * itemsize
    tk_max = max(_LANE, (_VMEM_BUDGET - fixed) // max(per_k, 1))
    tk_max = min(tk_max, _TK_CAP)
    if K <= tk_max:
        return K, K                          # single K step, full-extent block
    tk = (tk_max // _LANE) * _LANE
    while tk >= _LANE and K % tk != 0:       # prefer a divisor: no padding
        tk -= _LANE
    if tk >= _LANE:
        return tk, K
    tk = (tk_max // _LANE) * _LANE           # pad K: zero columns keep G exact
    k_pad = ((K + tk - 1) // tk) * tk
    return tk, k_pad


def _prep_features(x, with_target):
    a, b, c, d = x.shape
    M, K = a * b, c * d
    feats = x.reshape(M, K)                  # keep input dtype (bf16-friendly)
    tm = _choose_tm(M)
    tk, k_pad = _choose_tk(M, K, tm, feats.dtype.itemsize, with_target)
    if k_pad != K:
        feats = jnp.pad(feats, ((0, 0), (0, k_pad - K)))
    inv_norm = 1.0 / float(a * b * c * d)
    return feats, M, k_pad, tm, tk, inv_norm


def _gram_kernel(lhs_ref, rhs_ref, g_ref, acc_ref, *, inv_norm):
    """Row-block of G = (F @ F^T) * inv_norm, K-tiled with a VMEM accumulator."""
    k = pl.program_id(1)

    @pl.when(k == 0)
    def _init():
        acc_ref[...] = jnp.zeros_like(acc_ref)

    acc_ref[...] += jax.lax.dot_general(
        lhs_ref[...], rhs_ref[...],
        (((1,), (1,)), ((), ())),
        preferred_element_type=jnp.float32,
    )

    @pl.when(k == pl.num_programs(1) - 1)
    def _finalize():
        g_ref[...] = acc_ref[...] * inv_norm


def _style_loss_kernel(lhs_ref, rhs_ref, tgt_ref, g_ref, part_ref, acc_ref,
                       *, inv_norm):
    """Gram row-block of x plus the squared-error partial vs. the target gram."""
    k = pl.program_id(1)

    @pl.when(k == 0)
    def _init():
        acc_ref[...] = jnp.zeros_like(acc_ref)

    acc_ref[...] += jax.lax.dot_general(
        lhs_ref[...], rhs_ref[...],
        (((1,), (1,)), ((), ())),
        preferred_element_type=jnp.float32,
    )

    @pl.when(k == pl.num_programs(1) - 1)
    def _finalize():
        g = acc_ref[...] * inv_norm
        g_ref[...] = g
        diff = g - tgt_ref[...]
        part_ref[0, 0] = jnp.sum(diff * diff)


@jax.jit
def gram_matrix(x):
    """Pallas equivalent of the PyTorch gram_matrix()."""
    feats, M, K, tm, tk, inv_norm = _prep_features(x, with_target=False)
    n_m, n_k = M // tm, K // tk
    return pl.pallas_call(
        functools.partial(_gram_kernel, inv_norm=inv_norm),
        out_shape=jax.ShapeDtypeStruct((M, M), jnp.float32),
        grid_spec=pltpu.PrefetchScalarGridSpec(
            num_scalar_prefetch=0,
            grid=(n_m, n_k),
            in_specs=[
                pl.BlockSpec((tm, tk), lambda i, k: (i, k)),   # LHS row slab
                pl.BlockSpec((M, tk), lambda i, k: (0, k)),    # RHS (all rows)
            ],
            out_specs=pl.BlockSpec((tm, M), lambda i, k: (i, 0)),
            scratch_shapes=[pltpu.VMEM((tm, M), jnp.float32)],
        ),
        compiler_params=pltpu.CompilerParams(
            dimension_semantics=("parallel", "arbitrary"),
            vmem_limit_bytes=_VMEM_LIMIT,
        ),
        cost_estimate=pl.CostEstimate(
            flops=2 * M * M * K,
            transcendentals=0,
            bytes_accessed=feats.size * feats.dtype.itemsize * (1 + n_m)
            + M * M * 4,
        ),
    )(feats, feats)


@jax.jit
def _style_loss_forward(x, target):
    """Returns (G, mse_loss(G, target)) with the gram + loss fused in one kernel."""
    feats, M, K, tm, tk, inv_norm = _prep_features(x, with_target=True)
    n_m, n_k = M // tm, K // tk
    g, partials = pl.pallas_call(
        functools.partial(_style_loss_kernel, inv_norm=inv_norm),
        out_shape=(
            jax.ShapeDtypeStruct((M, M), jnp.float32),
            jax.ShapeDtypeStruct((n_m, 1), jnp.float32),
        ),
        grid_spec=pltpu.PrefetchScalarGridSpec(
            num_scalar_prefetch=0,
            grid=(n_m, n_k),
            in_specs=[
                pl.BlockSpec((tm, tk), lambda i, k: (i, k)),   # LHS row slab
                pl.BlockSpec((M, tk), lambda i, k: (0, k)),    # RHS (all rows)
                pl.BlockSpec((tm, M), lambda i, k: (i, 0)),    # target rows
            ],
            out_specs=(
                pl.BlockSpec((tm, M), lambda i, k: (i, 0)),
                pl.BlockSpec((1, 1), lambda i, k: (i, 0),
                             memory_space=pltpu.MemorySpace.SMEM),
            ),
            scratch_shapes=[pltpu.VMEM((tm, M), jnp.float32)],
        ),
        compiler_params=pltpu.CompilerParams(
            dimension_semantics=("parallel", "arbitrary"),
            vmem_limit_bytes=_VMEM_LIMIT,
        ),
        cost_estimate=pl.CostEstimate(
            flops=2 * M * M * K,
            transcendentals=0,
            bytes_accessed=feats.size * feats.dtype.itemsize * (1 + n_m)
            + 2 * M * M * 4,
        ),
    )(feats, feats, target)
    # F.mse_loss(G, target), reduction='mean' — tiny cross-block sum.
    loss = jnp.sum(partials) * (1.0 / float(M * M))
    return g, loss


class StyleLoss:
    """JAX/Pallas port of the PyTorch StyleLoss module."""

    def __init__(self, target_feature):
        # target gram matrix ("detached" parameter), computed with the same
        # Pallas gram kernel at init time.
        self.target = gram_matrix(target_feature)
        self.loss = None
        self.G = None

    def __call__(self, x):
        g, loss = _style_loss_forward(x, self.target)
        self.G = g                                      # exposed for testing
        self.loss = loss
        return x                                        # forward returns input


def _reference(x, target_feature):
    """Pure-JAX reference for correctness check."""
    def gm(t):
        a, b, c, d = t.shape
        f = t.reshape(a * b, c * d).astype(jnp.float32)
        return (f @ f.T) / (a * b * c * d)

    tgt = gm(target_feature)
    G = gm(x)
    return G, jnp.mean((G - tgt) ** 2)


if __name__ == "__main__":
    key = jax.random.PRNGKey(0)
    k1, k2 = jax.random.split(key)

    # small shapes consistent with the NCHW conv-feature input: (a, b, c, d)
    shape = (2, 4, 16, 16)
    target_feature = jax.random.normal(k1, shape, dtype=jnp.float32)
    x = jax.random.normal(k2, shape, dtype=jnp.float32)

    module = StyleLoss(target_feature)
    out = module(x)
    out = jax.block_until_ready(out)
    loss = jax.block_until_ready(module.loss)
    G = jax.block_until_ready(module.G)

    # verify against pure-JAX reference
    G_ref, loss_ref = _reference(x, target_feature)
    assert out.shape == x.shape and jnp.allclose(out, x)
    assert jnp.allclose(G, G_ref, rtol=1e-5, atol=1e-5)
    assert jnp.allclose(loss, loss_ref, rtol=1e-5, atol=1e-6)

    print("KERNEL_OK")
</pallas_src>

<mosaic_0001>
module attributes {stable_mosaic.version = 11 : i64} {
  func.func @_gram_kernel(%arg0: i32, %arg1: i32, %arg2: memref<8x256xf32, #tpu.memory_space<vmem>>, %arg3: memref<8x256xf32, #tpu.memory_space<vmem>>, %arg4: memref<8x8xf32, #tpu.memory_space<vmem>>, %arg5: memref<8x8xf32, #tpu.memory_space<vmem>>) attributes {dimension_semantics = [#tpu.dimension_semantics<parallel>, #tpu.dimension_semantics<arbitrary>], iteration_bounds = array<i64: 1, 1>, scalar_prefetch = 0 : i64, scratch_operands = 1 : i64, tpu.core_type = #tpu.core_type<tc>, window_params = [{transform_indices = @transform_0, window_bounds = array<i64: 8, 256>}, {transform_indices = @transform_1, window_bounds = array<i64: 8, 256>}, {transform_indices = @transform_2, window_bounds = array<i64: 8, 8>}]} {
    %c0_i32 = arith.constant 0 : i32
    %0 = arith.cmpi eq, %arg1, %c0_i32 : i32
    %1 = arith.extui %0 : i1 to i32
    %c0_i32_0 = arith.constant 0 : i32
    %2 = arith.cmpi ne, %1, %c0_i32_0 : i32
    scf.if %2 {
      %cst_10 = arith.constant 0.000000e+00 : f32
      %12 = vector.broadcast %cst_10 : f32 to vector<8x8xf32>
      %c0_11 = arith.constant 0 : index
      %c0_12 = arith.constant 0 : index
      %13 = vector.load %arg5[%c0_11, %c0_12] : memref<8x8xf32, #tpu.memory_space<vmem>>, vector<8x8xf32>
      tpu.vector_store %arg5[%c0_11, %c0_12], %12 {strides = array<i32>} : memref<8x8xf32, #tpu.memory_space<vmem>>, vector<8x8xf32>,
    } else {
    }
    %c0 = arith.constant 0 : index
    %c0_1 = arith.constant 0 : index
    %3 = vector.load %arg5[%c0, %c0_1] : memref<8x8xf32, #tpu.memory_space<vmem>>, vector<8x8xf32>
    %c0_2 = arith.constant 0 : index
    %c0_3 = arith.constant 0 : index
    %4 = vector.load %arg2[%c0_2, %c0_3] : memref<8x256xf32, #tpu.memory_space<vmem>>, vector<8x256xf32>
    %c0_4 = arith.constant 0 : index
    %c0_5 = arith.constant 0 : index
    %5 = vector.load %arg3[%c0_4, %c0_5] : memref<8x256xf32, #tpu.memory_space<vmem>>, vector<8x256xf32>
    %cst = arith.constant dense<0.000000e+00> : vector<8x8xf32>
    %6 = tpu.matmul %4, %5, %cst {dimension_numbers = #tpu.dot_dimension_numbers<[1], [1], [0], [0], [0, 0, 1, 0], [], []>} : vector<8x256xf32>, vector<8x256xf32>, vector<8x8xf32> -> vector<8x8xf32>
    %7 = arith.addf %3, %6 : vector<8x8xf32>
    %c0_6 = arith.constant 0 : index
    %c0_7 = arith.constant 0 : index
    %8 = vector.load %arg5[%c0_6, %c0_7] : memref<8x8xf32, #tpu.memory_space<vmem>>, vector<8x8xf32>
    tpu.vector_store %arg5[%c0_6, %c0_7], %7 {strides = array<i32>} : memref<8x8xf32, #tpu.memory_space<vmem>>, vector<8x8xf32>,
    %c0_i32_8 = arith.constant 0 : i32
    %9 = arith.cmpi eq, %arg1, %c0_i32_8 : i32
    %10 = arith.extui %9 : i1 to i32
    %c0_i32_9 = arith.constant 0 : i32
    %11 = arith.cmpi ne, %10, %c0_i32_9 : i32
    scf.if %11 {
      %c0_10 = arith.constant 0 : index
      %c0_11 = arith.constant 0 : index
      %12 = vector.load %arg5[%c0_10, %c0_11] : memref<8x8xf32, #tpu.memory_space<vmem>>, vector<8x8xf32>
      %cst_12 = arith.constant 4.8828125E-4 : f32
      %13 = vector.broadcast %cst_12 : f32 to vector<8x8xf32>
      %14 = arith.mulf %12, %13 : vector<8x8xf32>
      %c0_13 = arith.constant 0 : index
      %c0_14 = arith.constant 0 : index
      %15 = vector.load %arg4[%c0_13, %c0_14] : memref<8x8xf32, #tpu.memory_space<vmem>>, vector<8x8xf32>
      tpu.vector_store %arg4[%c0_13, %c0_14], %14 {strides = array<i32>} : memref<8x8xf32, #tpu.memory_space<vmem>>, vector<8x8xf32>,
    } else {
    }
    return
  }
  func.func @transform_0(%arg0: i32, %arg1: i32) -> (i32, i32) {
    %c0_i32 = arith.constant 0 : i32
    return %arg0, %arg1 : i32, i32
  }
  func.func @transform_1(%arg0: i32, %arg1: i32) -> (i32, i32) {
    %c0_i32 = arith.constant 0 : i32
    %c0_i32_0 = arith.constant 0 : i32
    return %c0_i32, %arg1 : i32, i32
  }
  func.func @transform_2(%arg0: i32, %arg1: i32) -> (i32, i32) {
    %c0_i32 = arith.constant 0 : i32
    %c0_i32_0 = arith.constant 0 : i32
    return %arg0, %c0_i32 : i32, i32
  }
}

</mosaic_0001>

<llo_original>
// kernel: gram_matrix.1
$region0: #{gram_matrix.1}
  #allocation0 [shape = 'u32[]', space=smem, size = 0x4, offset = 0x4, fixed_abs, tag = 'smem constant byte address 0x4 - core index']
  #allocation1 [shape = 'u32[72,128]{1,0:T(1,128)}', space=vmem, size = 0x9000, scoped, tag = 'internal scratch']
  #allocation2 [shape = 'f32[8,8]{1,0:T(8,128)}', space=vmem, size = 0x1000, scoped, tag = 'scratch operand']
  %s0 = inlined_call_operand.vmem [shape: f32[8,256], index: 0, kind: input, shape index: {}, may-alias: {0,1}]
  %s1 = inlined_call_operand.vmem [shape: f32[8,256], index: 1, kind: input, shape index: {}, may-alias: {0,1}]
  %s2 = inlined_call_operand.hbm [shape: f32[8,8], index: 2, kind: output, shape index: {}]
  %s3 = sld [smem:[#allocation0]]
  $region26: #{gram_matrix.1} parent=0
    _
  %s5 = ssub.s32 1, %s3
  %s6 = scalar_select 0, %s5, %s3
  $region1: #{gram_matrix.1} parent=0
    #allocation3 [shape = 'u8[4096]{0}', space=vmem, size = 0x1000, scoped, tag = 'output window, operand 0, single buffered']
    #allocation4 [shape = 's32[1]{0}', space=sflag, size = 0x4, scoped, tag = 'scoped memory for gram_matrix.1']
    %7 = vsyncpa [#allocation4], 0
    // Predicated region
    $region2: #{gram_matrix.1} parent=1 // pred_check
      _
    $region3: #{gram_matrix.1} parent=1 // pred_check_branch
      %9 = sbr.rel (0) target = $region5
    $region4: #{gram_matrix.1} parent=1 // pred_region
      _
    $region5: #{gram_matrix.1} parent=1 // pred_fallthru
      _
    // Predicated region
    $region6: #{gram_matrix.1} parent=1 // pred_check
      _
    $region7: #{gram_matrix.1} parent=1 // pred_check_branch
      %11 = sbr.rel (0) target = $region9
    $region8: #{gram_matrix.1} parent=1 // pred_region
      _
    $region9: #{gram_matrix.1} parent=1 // pred_fallthru
      _
    %p12 = scmp.eq.s32.totalorder 0, 0
    // Predicated region
    $region10: #{gram_matrix.1} parent=1 // pred_check
      %p13 = pneg %p12
    $region11: #{gram_matrix.1} parent=1 // pred_check_branch
      %15 = sbr.rel (%p13) target = $region13
    $region12: #{gram_matrix.1} parent=1 // pred_region
      %vm16 = vcmask 64512
      %17 = vst.msk [vmem:[#allocation2] sm:$0xff] %vm16, 0.0
    $region13: #{gram_matrix.1} parent=1 // pred_fallthru
      _
    %v18 = vld [vmem:[#allocation2] sm:$0xff]
    %v19 = vld [vmem:[%s0] sm:$0xff]
    %v20 = vld [vmem:[%s0 + $0x8] sm:$0xff]
    %v21 = vld [vmem:[%s1] sm:$0xff]
    %v22 = vld [vmem:[%s1 + $0x8] sm:$0xff]
    %23 = vmatpush.xpose.msra.mxu0 0.0
    %24 = vmatpush.xpose.msra.mxu0 0.0
    %25 = vmatpush.xpose.msra.mxu0 0.0
    %26 = vmatpush.xpose.msra.mxu0 0.0
    %27 = vmatpush.xpose.msra.mxu0 0.0
    %28 = vmatpush.xpose.msra.mxu0 0.0
    %29 = vmatpush.xpose.msra.mxu0 0.0
    %30 = vmatpush.xpose.msra.mxu0 0.0
    %31 = vmatpush.xpose.msra.mxu0 0.0
    %32 = vmatpush.xpose.msra.mxu0 0.0
    %33 = vmatpush.xpose.msra.mxu0 0.0
    %34 = vmatpush.xpose.msra.mxu0 0.0
    %35 = vmatpush.xpose.msra.mxu0 0.0
    %36 = vmatpush.xpose.msra.mxu0 0.0
    %37 = vmatpush.xpose.msra.mxu0 0.0
    %38 = vmatpush.xpose.msra.mxu0 %v21
    %39 = vmatmul.f32.gmra.mxu0 %v19
    %v40 = vpop.f32.mrf.mxu0
    %v41 = vadd.f32 0.0, %v40
    %42 = vdwg.mxu0
    %43 = vmatpush.xpose.msra.mxu0 0.0
    %44 = vmatpush.xpose.msra.mxu0 0.0
    %45 = vmatpush.xpose.msra.mxu0 0.0
    %46 = vmatpush.xpose.msra.mxu0 0.0
    %47 = vmatpush.xpose.msra.mxu0 0.0
    %48 = vmatpush.xpose.msra.mxu0 0.0
    %49 = vmatpush.xpose.msra.mxu0 0.0
    %50 = vmatpush.xpose.msra.mxu0 0.0
    %51 = vmatpush.xpose.msra.mxu0 0.0
    %52 = vmatpush.xpose.msra.mxu0 0.0
    %53 = vmatpush.xpose.msra.mxu0 0.0
    %54 = vmatpush.xpose.msra.mxu0 0.0
    %55 = vmatpush.xpose.msra.mxu0 0.0
    %56 = vmatpush.xpose.msra.mxu0 0.0
    %57 = vmatpush.xpose.msra.mxu0 0.0
    %58 = vmatpush.xpose.msra.mxu0 %v22
    %59 = vmatmul.f32.gmra.mxu0 %v20
    %v60 = vpop.f32.mrf.mxu0
    %v61 = vadd.f32 %v41, %v60
    %62 = vdwg.mxu0
    %v63 = vadd.f32 %v18, %v61
    %vm64 = vcmask 64512
    %65 = vst.msk [vmem:[#allocation2] sm:$0xff] %vm64, %v63
    // Predicated region
    $region14: #{gram_matrix.1} parent=1 // pred_check
      %p66 = pneg %p12
    $region15: #{gram_matrix.1} parent=1 // pred_check_branch
      %68 = sbr.rel (%p66) target = $region17
    $region16: #{gram_matrix.1} parent=1 // pred_region
      %v69 = vld [vmem:[#allocation2] sm:$0xff]
      %v70 = vmul.f32 %v69, 0.00048828125
      %71 = vst.msk [vmem:[#allocation3] sm:$0xff] %vm64, %v70
    $region17: #{gram_matrix.1} parent=1 // pred_fallthru
      _
    // Predicated region
    $region18: #{gram_matrix.1} parent=1 // pred_check
      _
    $region19: #{gram_matrix.1} parent=1 // pred_check_branch
      %73 = sbr.rel (0) target = $region21
    $region20: #{gram_matrix.1} parent=1 // pred_region
      %75 = vsyncadd [#allocation4], 0
      %s77 = sshll.u32 [#allocation3], 4
      %s78 = int_to_ptr.vmem [resolvable:$true] %s77
      %s79 = sshll.u32 %s2, 4
      %s80 = int_to_ptr.hbm [resolvable:$true] %s79
      %82 = dma.vmem_to_hbm [thread:$0]  %s78, 128, %s80, [#allocation4]
    $region21: #{gram_matrix.1} parent=1 // pred_fallthru
      _
    // Predicated region
    $region22: #{gram_matrix.1} parent=1 // pred_check
      _
    $region23: #{gram_matrix.1} parent=1 // pred_check_branch
      %84 = sbr.rel (0) target = $region25
    $region24: #{gram_matrix.1} parent=1 // pred_region
      %86 = dma.done [#allocation4], 128
    $region25: #{gram_matrix.1} parent=1 // pred_fallthru
      _
    %87 = vsyncpa [#allocation4], 1

</llo_original>
